<compile_context>
chip_gen: v7x
topology: tpu7x:2x2x1
jax: 0.10.0
libtpu: 0.0.40
codegen_flags: <defaults>
</compile_context>

<pallas_src>
import functools

import jax
import jax.numpy as jnp
from jax import lax
from jax.experimental import pallas as pl
from jax.experimental.pallas import tpu as pltpu


# ----------------------------- generation tuning -----------------------------

def _device_kind():
    try:
        return jax.devices()[0].device_kind.lower()
    except Exception:
        return ""


_KIND = _device_kind()
_IS_V7 = ("v7" in _KIND) or ("7x" in _KIND)
_IS_V6 = "v6" in _KIND

# v7x has only 64 MiB VMEM per TensorCore -> keep headroom; v5e/v6e have 128.
_VMEM_LIMIT = (36 if _IS_V7 else 48) * 1024 * 1024
# bf16 EUP exists on v6e/v7x (~2x exp throughput); keep f32 exp elsewhere.
_EXP_DTYPE = jnp.bfloat16 if (_IS_V6 or _IS_V7) else jnp.float32
# Bigger q tiles amortize K/V streaming on v6e/v7x; smaller kv tiles on v7x.
_Q_TILE_CAP = 256 if (_IS_V6 or _IS_V7) else 128
_KV_TILE_CAP = 256 if _IS_V7 else 512


def _pick_tile(dim, cap, align=8):
    """Largest divisor of `dim` that is <= cap and a multiple of `align`.

    Falls back to the full dimension (always a legal block shape) if no such
    divisor exists — never returns a non-divisor, never violates the (8, 128)
    block constraint, and never silently blows up VMEM with an oversized tile
    unless the dimension itself has no aligned divisor.
    """
    if dim <= cap:
        return dim
    start = (min(cap, dim) // align) * align
    for cand in range(start, 0, -align):
        if dim % cand == 0:
            return cand
    return dim


# ----------------------- tiled linear (bf16 MXU, f32 acc) -----------------------

def _linear_kernel(x_ref, w_ref, b_ref, o_ref, acc_ref):
    kk = pl.program_id(2)

    @pl.when(kk == 0)
    def _():
        acc_ref[...] = jnp.zeros_like(acc_ref)

    acc_ref[...] += jnp.dot(x_ref[...], w_ref[...],
                            preferred_element_type=jnp.float32)

    @pl.when(kk == pl.num_programs(2) - 1)
    def _():
        o_ref[...] = (acc_ref[...] + b_ref[...]).astype(o_ref.dtype)


def linear_pallas(x, w, b, out_dtype=None, tm_cap=256, tn_cap=512, tk_cap=512):
    M, K = x.shape
    _, N = w.shape
    out_dtype = x.dtype if out_dtype is None else out_dtype
    tm = _pick_tile(M, tm_cap, align=8)
    tn = _pick_tile(N, tn_cap, align=128)
    tk = _pick_tile(K, tk_cap, align=128)
    b2 = b.reshape(1, N).astype(jnp.float32)
    return pl.pallas_call(
        _linear_kernel,
        out_shape=jax.ShapeDtypeStruct((M, N), out_dtype),
        grid_spec=pltpu.PrefetchScalarGridSpec(
            num_scalar_prefetch=0,
            grid=(M // tm, N // tn, K // tk),
            in_specs=[
                pl.BlockSpec((tm, tk), lambda i, j, k: (i, k)),
                pl.BlockSpec((tk, tn), lambda i, j, k: (k, j)),
                pl.BlockSpec((1, tn), lambda i, j, k: (0, j)),
            ],
            out_specs=pl.BlockSpec((tm, tn), lambda i, j, k: (i, j)),
            scratch_shapes=[pltpu.VMEM((tm, tn), jnp.float32)],
        ),
        compiler_params=pltpu.CompilerParams(
            dimension_semantics=("parallel", "parallel", "arbitrary"),
            vmem_limit_bytes=_VMEM_LIMIT),
    )(x, w, b2)


# ------------------------- one-shot RoPE kernel (for K) -------------------------

def _rope_kernel(x_ref, cos_ref, sin_ref, o_ref, *, n_heads, key_dim):
    half = key_dim // 2
    cos1, cos2 = cos_ref[:, :half], cos_ref[:, half:]
    sin1, sin2 = sin_ref[:, :half], sin_ref[:, half:]
    for h in range(n_heads):
        hs = h * key_dim
        x1 = x_ref[0, :, hs:hs + half].astype(jnp.float32)
        x2 = x_ref[0, :, hs + half:hs + key_dim].astype(jnp.float32)
        o_ref[0, :, hs:hs + half] = (x1 * cos1 - x2 * sin1).astype(o_ref.dtype)
        o_ref[0, :, hs + half:hs + key_dim] = (x2 * cos2 + x1 * sin2).astype(o_ref.dtype)


def rope_pallas(x, cos, sin, *, n_heads, out_dtype=jnp.bfloat16, tile_cap=512):
    B, S, D = x.shape
    Dk = D // n_heads
    T = _pick_tile(S, tile_cap, align=8)
    kernel = functools.partial(_rope_kernel, n_heads=n_heads, key_dim=Dk)
    return pl.pallas_call(
        kernel,
        out_shape=jax.ShapeDtypeStruct((B, S, D), out_dtype),
        grid_spec=pltpu.PrefetchScalarGridSpec(
            num_scalar_prefetch=0,
            grid=(B, S // T),
            in_specs=[
                pl.BlockSpec((1, T, D), lambda b, i: (b, i, 0)),
                pl.BlockSpec((T, Dk), lambda b, i: (i, 0)),
                pl.BlockSpec((T, Dk), lambda b, i: (i, 0)),
            ],
            out_specs=pl.BlockSpec((1, T, D), lambda b, i: (b, i, 0)),
        ),
        compiler_params=pltpu.CompilerParams(
            dimension_semantics=("parallel", "parallel"),
            vmem_limit_bytes=_VMEM_LIMIT),
    )(x, cos, sin)


# -------------- fused RoPE-Q + registers + flash attention (all heads) --------------

def _attn_kernel(q_ref, k_ref, v_ref, cq_ref, sq_ref, rk_ref, rv_ref, o_ref,
                 qrot_ref, m_ref, l_ref, acc_ref,
                 *, n_heads, key_dim, n_registers, q_tile, kv_tile,
                 seq_q, seq_kv, sm_scale, exp_dtype):
    H, Dk = n_heads, key_dim
    half = Dk // 2
    qi = pl.program_id(1)
    kt = pl.program_id(2)
    offset = seq_kv - seq_q              # past length (bottom-right causal align)
    q0 = qi * q_tile
    k0 = kt * kv_tile

    # TODO(synk): for H >= ~8 replace the fully-unrolled head loops with a
    # lax.fori_loop over pl.ds(h*Dk, Dk) slices to bound vreg live ranges; for
    # Dk < 128 process two heads per slice so column slices stay lane-aligned.

    @pl.when(kt == 0)
    def _init():
        # Rotate q in split-half form (no lane roll/concat), fold sm_scale and
        # store once as bf16 (rotation math stays f32).
        cos1, cos2 = cq_ref[:, :half], cq_ref[:, half:]
        sin1, sin2 = sq_ref[:, :half], sq_ref[:, half:]
        for h in range(H):
            hs = h * Dk
            q1 = q_ref[0, :, hs:hs + half].astype(jnp.float32)
            q2 = q_ref[0, :, hs + half:hs + Dk].astype(jnp.float32)
            qrot_ref[:, hs:hs + half] = (
                (q1 * cos1 - q2 * sin1) * sm_scale).astype(qrot_ref.dtype)
            qrot_ref[:, hs + half:hs + Dk] = (
                (q2 * cos2 + q1 * sin2) * sm_scale).astype(qrot_ref.dtype)
        if n_registers > 0:
            # Initialize the online-softmax stats from the (always-visible,
            # un-rotated) register keys / values — no wrapper-side K/V concat.
            for h in range(H):
                hs = h * Dk
                qh = qrot_ref[:, hs:hs + Dk]
                s = lax.dot_general(qh, rk_ref[h], (((1,), (1,)), ((), ())),
                                    preferred_element_type=jnp.float32)
                m0 = jnp.max(s, axis=-1, keepdims=True)
                p = jnp.exp(s - m0)
                m_ref[h] = m0
                l_ref[h] = jnp.sum(p, axis=-1, keepdims=True)
                acc_ref[:, hs:hs + Dk] = jnp.dot(
                    p.astype(jnp.bfloat16), rv_ref[h],
                    preferred_element_type=jnp.float32)
        else:
            m_ref[...] = jnp.full_like(m_ref, -1e30)
            l_ref[...] = jnp.zeros_like(l_ref)
            acc_ref[...] = jnp.zeros_like(acc_ref)

    def _kv_update(masked):
        if masked:
            rows = q0 + lax.broadcasted_iota(jnp.int32, (q_tile, kv_tile), 0)
            cols = k0 + lax.broadcasted_iota(jnp.int32, (q_tile, kv_tile), 1)
            bias = jnp.where(cols <= rows + offset, 0.0, -1e30).astype(jnp.float32)
        for h in range(H):
            hs = h * Dk
            qh = qrot_ref[:, hs:hs + Dk]            # bf16, already scaled
            kh = k_ref[0, :, hs:hs + Dk]            # bf16, pre-rotated
            s = lax.dot_general(qh, kh, (((1,), (1,)), ((), ())),
                                preferred_element_type=jnp.float32)
            if masked:
                s = s + bias
            m_prev = m_ref[h]
            m_new = jnp.maximum(m_prev, jnp.max(s, axis=-1, keepdims=True))
            alpha = jnp.exp(m_prev - m_new)
            p = jnp.exp((s - m_new).astype(exp_dtype))   # bf16 EUP on v6e/v7x
            l_ref[h] = alpha * l_ref[h] + jnp.sum(
                p.astype(jnp.float32), axis=-1, keepdims=True)
            acc_ref[:, hs:hs + Dk] = alpha * acc_ref[:, hs:hs + Dk] + jnp.dot(
                p.astype(jnp.bfloat16), v_ref[0, :, hs:hs + Dk],
                preferred_element_type=jnp.float32)
            m_ref[h] = m_new

    # Interior tiles (fully visible) skip mask construction entirely; boundary
    # tiles apply it; fully-shadowed tiles do nothing (their DMA is also elided
    # by the clamped index_map in the wrapper).
    fully_visible = (k0 + kv_tile - 1) <= (q0 + offset)
    boundary = jnp.logical_and(k0 <= q0 + (q_tile - 1) + offset,
                               jnp.logical_not(fully_visible))

    @pl.when(fully_visible)
    def _():
        _kv_update(masked=False)

    @pl.when(boundary)
    def _():
        _kv_update(masked=True)

    @pl.when(kt == pl.num_programs(2) - 1)
    def _finalize():
        for h in range(H):
            hs = h * Dk
            inv = pl.reciprocal(l_ref[h], approx=True)
            o_ref[0, :, hs:hs + Dk] = (acc_ref[:, hs:hs + Dk] * inv).astype(o_ref.dtype)


def fused_rope_flash_attention(q, k, v, cos_q, sin_q, reg_k, reg_v, *,
                               n_heads, n_registers,
                               q_tile_cap=None, kv_tile_cap=None):
    B, S, D = q.shape
    Skv = k.shape[1]
    Dk = D // n_heads
    R = reg_k.shape[1]
    q_tile_cap = _Q_TILE_CAP if q_tile_cap is None else q_tile_cap
    kv_tile_cap = _KV_TILE_CAP if kv_tile_cap is None else kv_tile_cap
    Tq = _pick_tile(S, q_tile_cap, align=8)
    Tkv = _pick_tile(Skv, kv_tile_cap, align=8)
    offset = Skv - S

    # Clamp the kv block index to the last causally-visible tile of this q
    # tile: shadowed steps repeat the previous index so Pallas elides the DMA.
    def kv_index(b, i, j):
        last = (i * Tq + (Tq - 1) + offset) // Tkv
        return (b, jnp.minimum(j, last), 0)

    kernel = functools.partial(
        _attn_kernel, n_heads=n_heads, key_dim=Dk, n_registers=n_registers,
        q_tile=Tq, kv_tile=Tkv, seq_q=S, seq_kv=Skv, sm_scale=Dk ** -0.5,
        exp_dtype=_EXP_DTYPE)
    return pl.pallas_call(
        kernel,
        out_shape=jax.ShapeDtypeStruct((B, S, D), q.dtype),
        grid_spec=pltpu.PrefetchScalarGridSpec(
            num_scalar_prefetch=0,
            grid=(B, S // Tq, Skv // Tkv),
            in_specs=[
                pl.BlockSpec((1, Tq, D), lambda b, i, j: (b, i, 0)),    # q
                pl.BlockSpec((1, Tkv, D), kv_index),                    # k (rotated)
                pl.BlockSpec((1, Tkv, D), kv_index),                    # v
                pl.BlockSpec((Tq, Dk), lambda b, i, j: (i, 0)),         # cos_q
                pl.BlockSpec((Tq, Dk), lambda b, i, j: (i, 0)),         # sin_q
                pl.BlockSpec((n_heads, R, Dk), lambda b, i, j: (0, 0, 0)),
                pl.BlockSpec((n_heads, R, Dk), lambda b, i, j: (0, 0, 0)),
            ],
            out_specs=pl.BlockSpec((1, Tq, D), lambda b, i, j: (b, i, 0)),
            scratch_shapes=[
                pltpu.VMEM((Tq, D), jnp.bfloat16),           # rotated, scaled q
                pltpu.VMEM((n_heads, Tq, 1), jnp.float32),   # running max
                pltpu.VMEM((n_heads, Tq, 1), jnp.float32),   # running sum
                pltpu.VMEM((Tq, D), jnp.float32),            # output accumulator
            ],
        ),
        compiler_params=pltpu.CompilerParams(
            dimension_semantics=("parallel", "parallel", "arbitrary"),
            vmem_limit_bytes=_VMEM_LIMIT),
    )(q, k, v, cos_q, sin_q, reg_k, reg_v)


# --------------------------------- forward pass ---------------------------------

def lswt_attention_forward(params, config, embeddings, past_key_values,
                           rope_pos, rope_scale):
    B, S, D = embeddings.shape
    H = config["n_heads"]
    Dk = D // H
    R = config["n_registers"]
    out_dt = embeddings.dtype
    cdt = jnp.bfloat16                     # MXU compute dtype (f32 accumulation)

    # Fused QKV projection: the activations are streamed from HBM once.
    w_qkv = jnp.concatenate(
        [params["wq"], params["wk"], params["wv"]], axis=1).astype(cdt)
    b_qkv = jnp.concatenate([params["bq"], params["bk"], params["bv"]])
    x2d = embeddings.reshape(B * S, D).astype(cdt)
    qkv = linear_pallas(x2d, w_qkv, b_qkv, out_dtype=cdt)
    q = qkv[:, :D].reshape(B, S, D)
    k = qkv[:, D:2 * D].reshape(B, S, D)
    v = qkv[:, 2 * D:].reshape(B, S, D)

    if past_key_values is not None:
        pk, pv = past_key_values                               # (B, H, P, Dk)
        P = pk.shape[2]
        k = jnp.concatenate(
            [pk.astype(cdt).transpose(0, 2, 1, 3).reshape(B, P, D), k], axis=1)
        v = jnp.concatenate(
            [pv.astype(cdt).transpose(0, 2, 1, 3).reshape(B, P, D), v], axis=1)
    Skv = k.shape[1]

    # KV-cache outputs (pre-RoPE, module layout (B, H, Skv, Dk)).
    past_keys = k.reshape(B, Skv, H, Dk).transpose(0, 2, 1, 3).astype(out_dt)
    past_values = v.reshape(B, Skv, H, Dk).transpose(0, 2, 1, 3).astype(out_dt)

    # RoPE / xpos tables: fold the xpos scale into cos & sin once in the wrapper.
    pos_q = rope_pos[-S:].astype(jnp.float32)
    pos_k = rope_pos[-Skv:].astype(jnp.float32)
    if config["rope_xpos_enabled"]:
        scale_q = rope_scale[-S:].astype(jnp.float32)
        scale_k = rope_scale[-Skv:].astype(jnp.float32) ** (-1.0)
    else:
        scale_q = 1.0
        scale_k = 1.0
    cos_q = jnp.cos(pos_q) * scale_q
    sin_q = jnp.sin(pos_q) * scale_q
    cos_k = jnp.cos(pos_k) * scale_k
    sin_k = jnp.sin(pos_k) * scale_k

    # Pre-rotate K once (removes the per-q-tile RoPE-K recompute and the f32
    # krot VMEM scratch inside the attention kernel).
    k_rot = rope_pallas(k, cos_k, sin_k, n_heads=H, out_dtype=cdt)

    if R > 0:
        reg_k = params["reg_k"].reshape(H, R, Dk).astype(cdt)
        reg_v = params["reg_v"].reshape(H, R, Dk).astype(cdt)
    else:
        reg_k = jnp.zeros((H, 1, Dk), cdt)
        reg_v = jnp.zeros((H, 1, Dk), cdt)

    a = fused_rope_flash_attention(q, k_rot, v, cos_q, sin_q,
                                   reg_k, reg_v, n_heads=H, n_registers=R)

    o = linear_pallas(a.reshape(B * S, D), params["wo"].astype(cdt),
                      params["bo"], out_dtype=out_dt).reshape(B, S, D)
    # out_dropout: eval mode / p == 0 -> identity.
    # TODO(synk): training-mode attention/output dropout not implemented.
    return o, (past_keys, past_values)


# ----------------------------- pure-JAX reference -----------------------------

def reference_forward(params, config, x, rope_pos, rope_scale):
    B, S, D = x.shape
    H = config["n_heads"]
    Dk = D // H
    R = config["n_registers"]

    def lin(t, w, b):
        return t @ w + b

    q = lin(x, params["wq"], params["bq"]).reshape(B, S, H, Dk).transpose(0, 2, 1, 3)
    k = lin(x, params["wk"], params["bk"]).reshape(B, S, H, Dk).transpose(0, 2, 1, 3)
    v = lin(x, params["wv"], params["bv"]).reshape(B, S, H, Dk).transpose(0, 2, 1, 3)
    past = (k, v)

    cos = jnp.cos(rope_pos[-S:])
    sin = jnp.sin(rope_pos[-S:])

    def rot_half(t):
        t1, t2 = jnp.split(t, 2, axis=-1)
        return jnp.concatenate([-t2, t1], axis=-1)

    qr = q * cos + rot_half(q) * sin
    kr = k * cos + rot_half(k) * sin

    rk = jnp.broadcast_to(params["reg_k"], (B, H, R, Dk))
    rv = jnp.broadcast_to(params["reg_v"], (B, H, R, Dk))
    kr = jnp.concatenate([rk, kr], axis=2)
    vv = jnp.concatenate([rv, v], axis=2)
    K = kr.shape[2]

    s = jnp.einsum("bhsd,bhkd->bhsk", qr, kr) / jnp.sqrt(jnp.float32(Dk))
    mask = jnp.arange(K)[None, :] <= (jnp.arange(S)[:, None] + (K - S))
    s = jnp.where(mask, s, -1e30)
    p = jax.nn.softmax(s, axis=-1)
    a = jnp.einsum("bhsk,bhkd->bhsd", p, vv)
    a = a.transpose(0, 2, 1, 3).reshape(B, S, D)
    o = lin(a, params["wo"], params["bo"])
    return o, past


# ----------------------------------- main -----------------------------------

if __name__ == "__main__":
    B, S, D, H, R = 2, 8, 32, 4, 2
    Dk = D // H
    config = dict(n_heads=H, n_registers=R, rope_xpos_enabled=False)

    key = jax.random.PRNGKey(0)
    ks = jax.random.split(key, 11)

    def norm(k_, shape, std):
        return jax.random.normal(k_, shape, jnp.float32) * std

    params = dict(
        wq=norm(ks[0], (D, D), 0.02), bq=norm(ks[1], (D,), 0.02),
        wk=norm(ks[2], (D, D), 0.02), bk=norm(ks[3], (D,), 0.02),
        wv=norm(ks[4], (D, D), 0.02), bv=norm(ks[5], (D,), 0.02),
        wo=norm(ks[6], (D, D), 0.02), bo=norm(ks[7], (D,), 0.02),
        reg_k=norm(ks[8], (1, H, R, Dk), Dk ** -0.5),
        reg_v=norm(ks[9], (1, H, R, Dk), Dk ** -0.5),
    )
    embeddings = jax.random.normal(ks[10], (B, S, D), jnp.float32)

    # Standard RoPE position table (S, Dk) and placeholder xpos scale table.
    pos_idx = jnp.arange(S, dtype=jnp.float32)
    inv_freq = 1.0 / (10000.0 ** (jnp.arange(0, Dk, 2, dtype=jnp.float32) / Dk))
    freqs = pos_idx[:, None] * inv_freq[None, :]
    rope_pos = jnp.concatenate([freqs, freqs], axis=-1)       # (S, Dk)
    rope_scale = jnp.ones((S, Dk), jnp.float32)               # unused (xpos off)

    out, (pk, pv) = lswt_attention_forward(
        params, config, embeddings, None, rope_pos, rope_scale)
    jax.block_until_ready((out, pk, pv))

    ref_out, (ref_pk, ref_pv) = reference_forward(
        params, config, embeddings, rope_pos, rope_scale)

    assert out.shape == (B, S, D) and pk.shape == (B, H, S, Dk)
    assert jnp.allclose(out, ref_out, atol=2e-2, rtol=2e-2)
    assert jnp.allclose(pk, ref_pk, atol=2e-2, rtol=2e-2)
    assert jnp.allclose(pv, ref_pv, atol=2e-2, rtol=2e-2)

    print("KERNEL_OK")
</pallas_src>

<mosaic_0001>
module attributes {stable_mosaic.version = 11 : i64} {
  func.func @_linear_kernel(%arg0: i32, %arg1: i32, %arg2: i32, %arg3: memref<16x32xbf16, #tpu.memory_space<vmem>>, %arg4: memref<32x96xbf16, #tpu.memory_space<vmem>>, %arg5: memref<1x96xf32, #tpu.memory_space<vmem>>, %arg6: memref<16x96xbf16, #tpu.memory_space<vmem>>, %arg7: memref<16x96xf32, #tpu.memory_space<vmem>>) attributes {dimension_semantics = [#tpu.dimension_semantics<parallel>, #tpu.dimension_semantics<parallel>, #tpu.dimension_semantics<arbitrary>], iteration_bounds = array<i64: 1, 1, 1>, scalar_prefetch = 0 : i64, scratch_operands = 1 : i64, tpu.core_type = #tpu.core_type<tc>, window_params = [{transform_indices = @transform_0, window_bounds = array<i64: 16, 32>}, {transform_indices = @transform_1, window_bounds = array<i64: 32, 96>}, {transform_indices = @transform_2, window_bounds = array<i64: 1, 96>}, {transform_indices = @transform_3, window_bounds = array<i64: 16, 96>}]} {
    %c0_i32 = arith.constant 0 : i32
    %0 = arith.cmpi eq, %arg2, %c0_i32 : i32
    %1 = arith.extui %0 : i1 to i32
    %c0_i32_0 = arith.constant 0 : i32
    %2 = arith.cmpi ne, %1, %c0_i32_0 : i32
    scf.if %2 {
      %cst_10 = arith.constant 0.000000e+00 : f32
      %12 = vector.broadcast %cst_10 : f32 to vector<16x96xf32>
      %c0_11 = arith.constant 0 : index
      %c0_12 = arith.constant 0 : index
      %13 = vector.load %arg7[%c0_11, %c0_12] : memref<16x96xf32, #tpu.memory_space<vmem>>, vector<16x96xf32>
      tpu.vector_store %arg7[%c0_11, %c0_12], %12 {strides = array<i32>} : memref<16x96xf32, #tpu.memory_space<vmem>>, vector<16x96xf32>,
    } else {
    }
    %c0 = arith.constant 0 : index
    %c0_1 = arith.constant 0 : index
    %3 = vector.load %arg7[%c0, %c0_1] : memref<16x96xf32, #tpu.memory_space<vmem>>, vector<16x96xf32>
    %c0_2 = arith.constant 0 : index
    %c0_3 = arith.constant 0 : index
    %4 = vector.load %arg3[%c0_2, %c0_3] : memref<16x32xbf16, #tpu.memory_space<vmem>>, vector<16x32xbf16>
    %c0_4 = arith.constant 0 : index
    %c0_5 = arith.constant 0 : index
    %5 = vector.load %arg4[%c0_4, %c0_5] : memref<32x96xbf16, #tpu.memory_space<vmem>>, vector<32x96xbf16>
    %cst = arith.constant dense<0.000000e+00> : vector<16x96xf32>
    %6 = tpu.matmul %4, %5, %cst {dimension_numbers = #tpu.dot_dimension_numbers<[1], [0], [0], [1], [0, 0, 1, 1], [], []>} : vector<16x32xbf16>, vector<32x96xbf16>, vector<16x96xf32> -> vector<16x96xf32>
    %7 = arith.addf %3, %6 : vector<16x96xf32>
    %c0_6 = arith.constant 0 : index
    %c0_7 = arith.constant 0 : index
    %8 = vector.load %arg7[%c0_6, %c0_7] : memref<16x96xf32, #tpu.memory_space<vmem>>, vector<16x96xf32>
    tpu.vector_store %arg7[%c0_6, %c0_7], %7 {strides = array<i32>} : memref<16x96xf32, #tpu.memory_space<vmem>>, vector<16x96xf32>,
    %c0_i32_8 = arith.constant 0 : i32
    %9 = arith.cmpi eq, %arg2, %c0_i32_8 : i32
    %10 = arith.extui %9 : i1 to i32
    %c0_i32_9 = arith.constant 0 : i32
    %11 = arith.cmpi ne, %10, %c0_i32_9 : i32
    scf.if %11 {
      %c0_10 = arith.constant 0 : index
      %c0_11 = arith.constant 0 : index
      %12 = vector.load %arg7[%c0_10, %c0_11] : memref<16x96xf32, #tpu.memory_space<vmem>>, vector<16x96xf32>
      %c0_12 = arith.constant 0 : index
      %c0_13 = arith.constant 0 : index
      %13 = vector.load %arg5[%c0_12, %c0_13] : memref<1x96xf32, #tpu.memory_space<vmem>>, vector<1x96xf32>
      %14 = vector.broadcast %13 : vector<1x96xf32> to vector<16x96xf32>
      %15 = arith.addf %12, %14 : vector<16x96xf32>
      %16 = arith.truncf %15 : vector<16x96xf32> to vector<16x96xbf16>
      %c0_14 = arith.constant 0 : index
      %c0_15 = arith.constant 0 : index
      %17 = vector.load %arg6[%c0_14, %c0_15] : memref<16x96xbf16, #tpu.memory_space<vmem>>, vector<16x96xbf16>
      tpu.vector_store %arg6[%c0_14, %c0_15], %16 {strides = array<i32>} : memref<16x96xbf16, #tpu.memory_space<vmem>>, vector<16x96xbf16>,
    } else {
    }
    return
  }
  func.func @transform_0(%arg0: i32, %arg1: i32, %arg2: i32) -> (i32, i32) {
    %c0_i32 = arith.constant 0 : i32
    return %arg0, %arg2 : i32, i32
  }
  func.func @transform_1(%arg0: i32, %arg1: i32, %arg2: i32) -> (i32, i32) {
    %c0_i32 = arith.constant 0 : i32
    return %arg2, %arg1 : i32, i32
  }
  func.func @transform_2(%arg0: i32, %arg1: i32, %arg2: i32) -> (i32, i32) {
    %c0_i32 = arith.constant 0 : i32
    %c0_i32_0 = arith.constant 0 : i32
    return %c0_i32, %arg1 : i32, i32
  }
  func.func @transform_3(%arg0: i32, %arg1: i32, %arg2: i32) -> (i32, i32) {
    %c0_i32 = arith.constant 0 : i32
    return %arg0, %arg1 : i32, i32
  }
}

</mosaic_0001>

<llo_original>
// kernel: tpu_custom_call.1
$region0: #{tpu_custom_call.1}
  #allocation0 [shape = 'u32[]', space=smem, size = 0x4, offset = 0x4, fixed_abs, tag = 'smem constant byte address 0x4 - core index']
  #allocation1 [shape = 'u32[144,128]{1,0:T(1,128)}', space=vmem, size = 0x12000, scoped, tag = 'internal scratch']
  #allocation2 [shape = 'f32[16,96]{1,0:T(8,128)}', space=vmem, size = 0x2000, scoped, tag = 'scratch operand']
  %s0 = inlined_call_operand.hbm [shape: bf16[16,32], index: 0, kind: input, shape index: {}]
  %s1 = inlined_call_operand.hbm [shape: bf16[32,96], index: 1, kind: input, shape index: {}]
  %s2 = inlined_call_operand.vmem [shape: f32[1,96], index: 2, kind: input, shape index: {}]
  %s3 = inlined_call_operand.hbm [shape: bf16[16,96], index: 3, kind: output, shape index: {}]
  %s4 = sld [smem:[#allocation0]]
  $region38: #{tpu_custom_call.1} parent=0
    _
  %s6 = ssub.s32 1, %s4
  %s7 = scalar_select 0, %s6, %s4
  $region1: #{tpu_custom_call.1} parent=0
    #allocation3 [shape = 'u8[4096]{0}', space=vmem, size = 0x1000, scoped, tag = 'input window, operand 0, single buffered']
    #allocation4 [shape = 's32[1]{0}', space=sflag, size = 0x4, scoped, tag = 'scoped memory for tpu_custom_call.1']
    #allocation5 [shape = 's32[1]{0}', space=sflag, size = 0x4, scoped, tag = 'scoped memory for tpu_custom_call.1']
    #allocation6 [shape = 'u8[8192]{0}', space=vmem, size = 0x2000, scoped, tag = 'input window, operand 1, single buffered']
    #allocation7 [shape = 's32[1]{0}', space=sflag, size = 0x4, scoped, tag = 'scoped memory for tpu_custom_call.1']
    #allocation8 [shape = 'u8[4096]{0}', space=vmem, size = 0x1000, scoped, tag = 'output window, operand 0, single buffered']
    %8 = vsyncpa [#allocation4], 0
    %9 = vsyncpa [#allocation7], 0
    %10 = vsyncpa [#allocation5], 0
    // Predicated region
    $region2: #{tpu_custom_call.1} parent=1 // pred_check
      _
    $region3: #{tpu_custom_call.1} parent=1 // pred_check_branch
      %12 = sbr.rel (0) target = $region5
    $region4: #{tpu_custom_call.1} parent=1 // pred_region
      %s14 = ssub.s32 128, 128
      %15 = vsyncadd [#allocation4], %s14
      %s16 = sshll.u32 [#allocation3], 4
      %s17 = int_to_ptr.vmem [resolvable:$true] %s16
      %22 = dma.hbm_to_vmem [thread:$0]  %s0, 128, %s17, [#allocation4], 64, 64, 4
    $region5: #{tpu_custom_call.1} parent=1 // pred_fallthru
      _
    // Predicated region
    $region6: #{tpu_custom_call.1} parent=1 // pred_check
      _
    $region7: #{tpu_custom_call.1} parent=1 // pred_check_branch
      %24 = sbr.rel (0) target = $region9
    $region8: #{tpu_custom_call.1} parent=1 // pred_region
      %s26 = ssub.s32 256, 256
      %27 = vsyncadd [#allocation7], %s26
      %s28 = sshll.u32 [#allocation6], 4
      %s29 = int_to_ptr.vmem [resolvable:$true] %s28
      %34 = dma.hbm_to_vmem [thread:$0]  %s1, 256, %s29, [#allocation7], 64, 64, 4
    $region9: #{tpu_custom_call.1} parent=1 // pred_fallthru
      _
    // Predicated region
    $region10: #{tpu_custom_call.1} parent=1 // pred_check
      _
    $region11: #{tpu_custom_call.1} parent=1 // pred_check_branch
      %36 = sbr.rel (0) target = $region13
    $region12: #{tpu_custom_call.1} parent=1 // pred_region
      _
    $region13: #{tpu_custom_call.1} parent=1 // pred_fallthru
      _
    // Predicated region
    $region14: #{tpu_custom_call.1} parent=1 // pred_check
      _
    $region15: #{tpu_custom_call.1} parent=1 // pred_check_branch
      %38 = sbr.rel (0) target = $region17
    $region16: #{tpu_custom_call.1} parent=1 // pred_region
      %39 = dma.done [#allocation4], 128
    $region17: #{tpu_custom_call.1} parent=1 // pred_fallthru
      _
    // Predicated region
    $region18: #{tpu_custom_call.1} parent=1 // pred_check
      _
    $region19: #{tpu_custom_call.1} parent=1 // pred_check_branch
      %41 = sbr.rel (0) target = $region21
    $region20: #{tpu_custom_call.1} parent=1 // pred_region
      %42 = dma.done [#allocation7], 256
    $region21: #{tpu_custom_call.1} parent=1 // pred_fallthru
      _
    %p44 = scmp.eq.s32.totalorder 0, 0
    // Predicated region
    $region22: #{tpu_custom_call.1} parent=1 // pred_check
      %p45 = pneg %p44
    $region23: #{tpu_custom_call.1} parent=1 // pred_check_branch
      %47 = sbr.rel (%p45) target = $region25
    $region24: #{tpu_custom_call.1} parent=1 // pred_region
      %vm48 = vcmask 785408
      %49 = vst.msk [vmem:[#allocation2] sm:$0xff] %vm48, 0.0
      %50 = vst.msk [vmem:[#allocation2 + $0x8] sm:$0xff] %vm48, 0.0
    $region25: #{tpu_custom_call.1} parent=1 // pred_fallthru
      _
    %v51 = vld [vmem:[#allocation2] sm:$0xff]
    %v52 = vld [vmem:[#allocation2 + $0x8] sm:$0xff]
    %v53 = vld [vmem:[#allocation3] sm:$0xf]
    %v54 = vld [vmem:[#allocation3 + $0x4] sm:$0xf]
    %v55 = vld [vmem:[#allocation6] sm:$0xf]
    %v56 = vld [vmem:[#allocation6 + $0x4] sm:$0xf]
    %v57 = vld [vmem:[#allocation6 + $0x8] sm:$0xf]
    %v58 = vld [vmem:[#allocation6 + $0xc] sm:$0xf]
    %v61 = vunpack.c.l.b16 %v53
    %v62 = vunpack.c.l.b16 %v54
    %v63 = vpack.c.b16 %v62, %v61
    %v68 = vunpack.c.l.b16 %v55
    %v69 = vunpack.c.l.b16 %v56
    %v70 = vunpack.c.l.b16 %v57
    %v71 = vunpack.c.l.b16 %v58
    %v72 = vpack.c.b16 %v69, %v68
    %v73 = vpack.c.b16 %v71, %v70
    %vm76 = vcmask 261120
    %v78 = vsel %vm76, %v63, 0
    %80 = vmatprep.subr.bf16.mxu0 0
    %81 = vmatpush1.bf16.msra.mxu0 %v72
    %82 = vmatprep.subr.bf16.mxu0 0
    %83 = vmatpush1.bf16.msra.mxu0 %v73
    %84 = vmatprep.subr.bf16.mxu0 0
    %85 = vmatpush1.bf16.msra.mxu0 0
    %86 = vmatprep.subr.bf16.mxu0 0
    %87 = vmatpush1.bf16.msra.mxu0 0
    %88 = vmatprep.subr.bf16.mxu0 0
    %89 = vmatpush1.bf16.msra.mxu0 0
    %90 = vmatprep.subr.bf16.mxu0 0
    %91 = vmatpush1.bf16.msra.mxu0 0
    %92 = vmatprep.subr.bf16.mxu0 0
    %93 = vmatpush1.bf16.msra.mxu0 0
    %94 = vmatprep.subr.bf16.mxu0 0
    %95 = vmatpush1.bf16.msra.mxu0 0
    %96 = vmatprep.subr.bf16.mxu0 0
    %97 = vmatpush1.bf16.msra.mxu0 0
    %98 = vmatprep.subr.bf16.mxu0 0
    %99 = vmatpush1.bf16.msra.mxu0 0
    %100 = vmatprep.subr.bf16.mxu0 0
    %101 = vmatpush1.bf16.msra.mxu0 0
    %102 = vmatprep.subr.bf16.mxu0 0
    %103 = vmatpush1.bf16.msra.mxu0 0
    %104 = vmatprep.subr.bf16.mxu0 0
    %105 = vmatpush1.bf16.msra.mxu0 0
    %106 = vmatprep.subr.bf16.mxu0 0
    %107 = vmatpush1.bf16.msra.mxu0 0
    %108 = vmatprep.subr.bf16.mxu0 0
    %109 = vmatpush1.bf16.msra.mxu0 0
    %110 = vmatprep.subr.bf16.mxu0 0
    %111 = vmatpush1.bf16.msra.mxu0 0
    %112 = vmatprep.mubr.bf16.mxu0 0
    %113 = vmatmul.mubr.bf16.gmra.mrb[0].mxu0 %v78
    %v114 = vpop.f32.mrb[0].mxu0
    %v115 = vadd.f32 0.0, %v114
    %v116 = vpop.f32.mrb[0].mxu0
    %v117 = vpop.f32.mrb[0].mxu0
    %v118 = vadd.f32 0.0, %v117
    %v119 = vpop.f32.mrb[0].mxu0
    %120 = vdwg.mxu0
    %v121 = vadd.f32 %v51, %v115
    %v122 = vadd.f32 %v52, %v118
    %vm123 = vcmask 785408
    %124 = vst.msk [vmem:[#allocation2] sm:$0xff] %vm123, %v121
    %125 = vst.msk [vmem:[#allocation2 + $0x8] sm:$0xff] %vm123, %v122
    // Predicated region
    $region26: #{tpu_custom_call.1} parent=1 // pred_check
      %p126 = pneg %p44
    $region27: #{tpu_custom_call.1} parent=1 // pred_check_branch
      %128 = sbr.rel (%p126) target = $region29
    $region28: #{tpu_custom_call.1} parent=1 // pred_region
      %v129 = vld [vmem:[#allocation2] sm:$0xff]
      %v130 = vld [vmem:[#allocation2 + $0x8] sm:$0xff]
      %v131 = vld [vmem:[%s2] sm:$0x1]
      %v133 = vlaneseq
      %v134 = vshrl.u32 %v133, 7
      %v135 = vsub.s32 0, %v134
      %v136 = vrot.slane %v131, %v135
      %v138 = vadd.f32 %v129, %v136
      %v139 = vadd.f32 %v130, %v136
      %v140 = vpack.c.bf16 %v139, %v138
      %v142 = vunpack.c.l.b16 %v140
      %v143 = vunpack.c.h.b16 %v140
      %v144 = vpack.c.b16 %v142, %v142
      %v145 = vpack.c.b16 %v143, %v143
      %vm148 = vcmask 781312
      %149 = vst.msk [vmem:[#allocation8] sm:$0xf] %vm148, %v144
      %150 = vst.msk [vmem:[#allocation8 + $0x4] sm:$0xf] %vm148, %v145
    $region29: #{tpu_custom_call.1} parent=1 // pred_fallthru
      _
    // Predicated region
    $region30: #{tpu_custom_call.1} parent=1 // pred_check
      _
    $region31: #{tpu_custom_call.1} parent=1 // pred_check_branch
      %152 = sbr.rel (0) target = $region33
    $region32: #{tpu_custom_call.1} parent=1 // pred_region
      %s154 = ssub.s32 128, 128
      %155 = vsyncadd [#allocation5], %s154
      %s156 = sshll.u32 [#allocation8], 4
      %s157 = int_to_ptr.vmem [resolvable:$true] %s156
      %162 = dma.vmem_to_hbm [thread:$0]  %s157, 128, %s3, [#allocation5], 64, 64, 4
    $region33: #{tpu_custom_call.1} parent=1 // pred_fallthru
      _
    // Predicated region
    $region34: #{tpu_custom_call.1} parent=1 // pred_check
      _
    $region35: #{tpu_custom_call.1} parent=1 // pred_check_branch
      %164 = sbr.rel (0) target = $region37
    $region36: #{tpu_custom_call.1} parent=1 // pred_region
      %165 = dma.done [#allocation5], 128
    $region37: #{tpu_custom_call.1} parent=1 // pred_fallthru
      _
    %166 = vsyncpa [#allocation4], 1
    %167 = vsyncpa [#allocation7], 1
    %168 = vsyncpa [#allocation5], 1

</llo_original>
